<compile_context>
chip_gen: v5e
topology: v5e:2x2
jax: 0.10.0
libtpu: 0.0.40
codegen_flags: <defaults>
</compile_context>

<pallas_src>
import functools

import jax
import jax.numpy as jnp
from jax.experimental import pallas as pl
from jax.experimental.pallas import tpu as pltpu  # noqa: F401  (TPU backend)


# ---------------------------------------------------------------------------
# Fused kernel: relu(xp @ w0 + b0) -> per-group VPU contraction with w1 -> sigmoid
# ---------------------------------------------------------------------------
def _fused_forward_kernel(xp_ref, w0_ref, b0_ref, w1_ref, b1_ref, o_ref, *, groups):
    c_mid = w0_ref.shape[1]            # 56
    rows_per_group = w1_ref.shape[0]   # 64 (= 8x8 conv1 receptive field)

    # Stage 1: conv0 (with folded conv_transpose) + bias + relu  -> MXU
    v3 = jnp.dot(xp_ref[...], w0_ref[...], preferred_element_type=jnp.float32)
    v3 = jnp.maximum(v3 + b0_ref[...], 0.0)                    # (G*64, 56)

    # Stage 2: conv1 has a single output channel -> VPU multiply + XLU reductions
    # (sublane-aligned split: 64 is a multiple of 8, last dim unchanged)
    v3 = v3.reshape(groups, rows_per_group, c_mid)             # (G, 64, 56)
    v4 = jnp.sum(v3 * w1_ref[...], axis=2)                     # lane reduce  -> (G, 64)
    v4 = jnp.sum(v4, axis=1, keepdims=True)                    # sublane reduce -> (G, 1)

    o_ref[...] = jax.nn.sigmoid(v4 + b1_ref[...]).astype(o_ref.dtype)


def fused_forward(xp, w0m, b0m, w1m, b1m, groups):
    """Whole forward (both convs + activations) as a single Pallas call."""
    M, K = xp.shape
    _, C0 = w0m.shape
    kernel = functools.partial(_fused_forward_kernel, groups=groups)

    flops = 2 * M * K * C0 + 4 * M * C0          # MXU matmul + VPU mult/reduce
    bytes_accessed = 4 * (xp.size + w0m.size + b0m.size + w1m.size + b1m.size + groups)
    cost = pl.CostEstimate(flops=flops, transcendentals=groups,
                           bytes_accessed=bytes_accessed)

    return pl.pallas_call(
        kernel,
        out_shape=jax.ShapeDtypeStruct((groups, 1), jnp.float32),
        in_specs=[
            pl.BlockSpec((M, K), lambda: (0, 0)),
            pl.BlockSpec((K, C0), lambda: (0, 0)),
            pl.BlockSpec((1, C0), lambda: (0, 0)),
            pl.BlockSpec((w1m.shape[0], C0), lambda: (0, 0)),
            pl.BlockSpec((1, 1), lambda: (0, 0)),
        ],
        out_specs=pl.BlockSpec((groups, 1), lambda: (0, 0)),
        cost_estimate=cost,
    )(xp, w0m, b0m, w1m, b1m)


# ---------------------------------------------------------------------------
# Parameter prep: fold the 1x1 ConvTranspose into conv0, pre-permute weights so
# in-kernel K / row order matches the patch memory layout.
# ---------------------------------------------------------------------------
def prepare_params(p):
    wtm = p["wt"][:, :, 0, 0]                               # (15, 12)
    # w0'[o, i15, kh, kw] = sum_c12 w0[o, c12, kh, kw] * wt[i15, c12]
    w0f = jnp.einsum("odhw,id->oihw", p["w0"], wtm)         # (56, 15, 8, 8)
    b0f = p["b0"] + jnp.einsum("odhw,d->o", p["w0"], p["bt"])

    c0, cin, kh, kw = w0f.shape
    # K order (c, kh, kw) to match patch columns
    w0m = jnp.transpose(w0f, (1, 2, 3, 0)).reshape(cin * kh * kw, c0)
    b0m = b0f.reshape(1, c0)

    _, c1i, k1h, k1w = p["w1"].shape
    # rows in (kh, kw) order, columns = channels, matching v3 layout in-kernel
    w1m = jnp.transpose(p["w1"][0], (1, 2, 0)).reshape(k1h * k1w, c1i)
    b1m = p["b1"].reshape(1, 1)
    return w0m, b0m, w1m, b1m


def model_forward(x, p):
    N, C, H, W = x.shape
    assert H % 64 == 0 and W % 64 == 0, "spatial dims must survive two stride-8 convs"
    OH2, OW2 = H // 64, W // 64
    G = N * OH2 * OW2

    w0m, b0m, w1m, b1m = prepare_params(p)

    # Single space-to-depth pass: rows grouped per conv1 output position
    # (inner row order = (kh2, kw2)); columns in (c, kh0, kw0) order == w0m rows.
    xp = (x.reshape(N, C, OH2, 8, 8, OW2, 8, 8)
            .transpose(0, 2, 5, 3, 6, 1, 4, 7)
            .reshape(G * 64, C * 64))

    out = fused_forward(xp, w0m, b0m, w1m, b1m, G)          # (G, 1)
    return out.reshape(N, OH2, OW2, 1).transpose(0, 3, 1, 2)  # NCHW


# ---------------------------------------------------------------------------
# Pure-JAX reference (no Pallas) for a numerical sanity check.
# ---------------------------------------------------------------------------
def _conv_k8_ref(x, w, b):
    N, C, H, W = x.shape
    xp = x.reshape(N, C, H // 8, 8, W // 8, 8)
    out = jnp.einsum("ncapbq,ocpq->noab", xp, w)
    return out + b[None, :, None, None]


def reference_forward(x, p):
    v1 = jnp.einsum("nihw,ij->njhw", x, p["wt"][:, :, 0, 0]) + p["bt"][None, :, None, None]
    v3 = jnp.maximum(_conv_k8_ref(v1, p["w0"], p["b0"]), 0.0)
    v4 = _conv_k8_ref(v3, p["w1"], p["b1"])
    return jax.nn.sigmoid(v4)


def init_params(key):
    ks = jax.random.split(key, 6)
    wt = jax.random.normal(ks[0], (15, 12, 1, 1), jnp.float32) / jnp.sqrt(15.0)
    bt = jax.random.normal(ks[1], (12,), jnp.float32) * 0.01
    w0 = jax.random.normal(ks[2], (56, 12, 8, 8), jnp.float32) / jnp.sqrt(12.0 * 64.0)
    b0 = jax.random.normal(ks[3], (56,), jnp.float32) * 0.01
    w1 = jax.random.normal(ks[4], (1, 56, 8, 8), jnp.float32) / jnp.sqrt(56.0 * 64.0)
    b1 = jax.random.normal(ks[5], (1,), jnp.float32) * 0.01
    return dict(wt=wt, bt=bt, w0=w0, b0=b0, w1=w1, b1=b1)


if __name__ == "__main__":
    key = jax.random.PRNGKey(0)
    kx, kp = jax.random.split(key)
    # NCHW input; 64x64 spatial is the smallest that survives two stride-8 convs.
    x = jax.random.normal(kx, (2, 15, 64, 64), jnp.float32)
    params = init_params(kp)

    out = jax.jit(model_forward)(x, params)
    out = jax.block_until_ready(out)

    assert out.shape == (2, 1, 1, 1), out.shape
    assert bool(jnp.all((out >= 0.0) & (out <= 1.0)))        # sigmoid range sanity

    ref = reference_forward(x, params)
    assert bool(jnp.allclose(out, ref, rtol=1e-2, atol=1e-2)), (out, ref)

    print("KERNEL_OK")
</pallas_src>

<mosaic_0001>
module attributes {stable_mosaic.version = 11 : i64} {
  func.func @_fused_forward_kernel(%arg0: memref<128x960xf32, #tpu.memory_space<vmem>>, %arg1: memref<960x56xf32, #tpu.memory_space<vmem>>, %arg2: memref<1x56xf32, #tpu.memory_space<vmem>>, %arg3: memref<64x56xf32, #tpu.memory_space<vmem>>, %arg4: memref<1x1xf32, #tpu.memory_space<vmem>>, %arg5: memref<2x1xf32, #tpu.memory_space<vmem>>) attributes {dimension_semantics = [], scalar_prefetch = 0 : i64, scratch_operands = 0 : i64, tpu.core_type = #tpu.core_type<tc>} {
    %c0 = arith.constant 0 : index
    %c0_0 = arith.constant 0 : index
    %0 = vector.load %arg0[%c0, %c0_0] : memref<128x960xf32, #tpu.memory_space<vmem>>, vector<128x960xf32>
    %c0_1 = arith.constant 0 : index
    %c0_2 = arith.constant 0 : index
    %1 = vector.load %arg1[%c0_1, %c0_2] : memref<960x56xf32, #tpu.memory_space<vmem>>, vector<960x56xf32>
    %cst = arith.constant dense<0.000000e+00> : vector<128x56xf32>
    %2 = tpu.matmul %0, %1, %cst {dimension_numbers = #tpu.dot_dimension_numbers<[1], [0], [0], [1], [0, 0, 1, 1], [], []>} : vector<128x960xf32>, vector<960x56xf32>, vector<128x56xf32> -> vector<128x56xf32>
    %c0_3 = arith.constant 0 : index
    %c0_4 = arith.constant 0 : index
    %3 = vector.load %arg2[%c0_3, %c0_4] : memref<1x56xf32, #tpu.memory_space<vmem>>, vector<1x56xf32>
    %4 = vector.broadcast %3 : vector<1x56xf32> to vector<128x56xf32>
    %5 = arith.addf %2, %4 : vector<128x56xf32>
    %cst_5 = arith.constant 0.000000e+00 : f32
    %6 = vector.broadcast %cst_5 : f32 to vector<128x56xf32>
    %7 = arith.maximumf %5, %6 : vector<128x56xf32>
    %8 = vector.shape_cast %7 : vector<128x56xf32> to vector<2x64x56xf32>
    %c0_6 = arith.constant 0 : index
    %c0_7 = arith.constant 0 : index
    %9 = vector.load %arg3[%c0_6, %c0_7] : memref<64x56xf32, #tpu.memory_space<vmem>>, vector<64x56xf32>
    %10 = vector.shape_cast %9 : vector<64x56xf32> to vector<1x64x56xf32>
    %11 = vector.broadcast %10 : vector<1x64x56xf32> to vector<2x64x56xf32>
    %12 = arith.mulf %8, %11 : vector<2x64x56xf32>
    %cst_8 = arith.constant dense<0.000000e+00> : vector<2x64xf32>
    %13 = vector.multi_reduction <add>, %12, %cst_8 [2] : vector<2x64x56xf32> to vector<2x64xf32>
    %cst_9 = arith.constant dense<0.000000e+00> : vector<2xf32>
    %14 = vector.multi_reduction <add>, %13, %cst_9 [1] : vector<2x64xf32> to vector<2xf32>
    %15 = vector.shape_cast %14 : vector<2xf32> to vector<2x1xf32>
    %c0_10 = arith.constant 0 : index
    %c0_11 = arith.constant 0 : index
    %16 = vector.load %arg4[%c0_10, %c0_11] : memref<1x1xf32, #tpu.memory_space<vmem>>, vector<1x1xf32>
    %17 = vector.broadcast %16 : vector<1x1xf32> to vector<2x1xf32>
    %18 = arith.addf %15, %17 : vector<2x1xf32>
    %19 = arith.negf %18 : vector<2x1xf32>
    %20 = math.exp %19 : vector<2x1xf32>
    %cst_12 = arith.constant 1.000000e+00 : f32
    %21 = vector.broadcast %cst_12 : f32 to vector<2x1xf32>
    %22 = arith.addf %21, %20 : vector<2x1xf32>
    %23 = arith.divf %21, %22 : vector<2x1xf32>
    %c0_13 = arith.constant 0 : index
    %c0_14 = arith.constant 0 : index
    %24 = vector.load %arg5[%c0_13, %c0_14] : memref<2x1xf32, #tpu.memory_space<vmem>>, vector<2x1xf32>
    tpu.vector_store %arg5[%c0_13, %c0_14], %23 {strides = array<i32>} : memref<2x1xf32, #tpu.memory_space<vmem>>, vector<2x1xf32>,
    return
  }
}

</mosaic_0001>

<llo_original>
// kernel: model_forward.1
$region0: #{model_forward.1}
  #allocation0 [shape = 'u32[]', space=smem, size = 0x4, offset = 0x4, fixed_abs, tag = 'smem constant byte address 0x4 - core index']
  #allocation1 [shape = 'u32[72,128]{1,0:T(1,128)}', space=vmem, size = 0x9000, scoped, tag = 'internal scratch']
  #allocation2 [shape = 'f32[1,1]{1,0:T(1,128)S(1)}', space=vmem, size = 0x200, scoped, tag = 'scoped memory for model_forward.1']
  %s0 = inlined_call_operand.vmem [shape: f32[128,960], index: 0, kind: input, shape index: {}]
  %s1 = inlined_call_operand.vmem [shape: f32[960,56], index: 1, kind: input, shape index: {}]
  %s2 = inlined_call_operand.vmem [shape: f32[1,56], index: 2, kind: input, shape index: {}]
  %s3 = inlined_call_operand.vmem [shape: f32[64,56], index: 3, kind: input, shape index: {}]
  %s4 = inlined_call_operand.<no memory space> [shape: f32[1,1], index: 4, kind: input, shape index: {}]
  %s5 = inlined_call_operand.vmem [shape: f32[2,1], index: 5, kind: output, shape index: {}]
  %s6 = sld [smem:[#allocation0]]
  $region30: #{model_forward.1} parent=0
    _
  %s8 = ssub.s32 1, %s6
  %s9 = scalar_select 0, %s8, %s6
  %v10 = vstv %s4
  %11 = vst [vmem:[#allocation2] sm:$0x1] %v10
  // Predicated region
  $region2: #{model_forward.1} parent=0 // pred_check
    _
  $region3: #{model_forward.1} parent=0 // pred_check_branch
    %13 = sbr.rel (0) target = $region5
  $region4: #{model_forward.1} parent=0 // pred_region
    _
  $region5: #{model_forward.1} parent=0 // pred_fallthru
    _
  // Predicated region
  $region6: #{model_forward.1} parent=0 // pred_check
    _
  $region7: #{model_forward.1} parent=0 // pred_check_branch
    %15 = sbr.rel (0) target = $region9
  $region8: #{model_forward.1} parent=0 // pred_region
    _
  $region9: #{model_forward.1} parent=0 // pred_fallthru
    _
  // Predicated region
  $region10: #{model_forward.1} parent=0 // pred_check
    _
  $region11: #{model_forward.1} parent=0 // pred_check_branch
    %17 = sbr.rel (0) target = $region13
  $region12: #{model_forward.1} parent=0 // pred_region
    _
  $region13: #{model_forward.1} parent=0 // pred_fallthru
    _
  // Predicated region
  $region14: #{model_forward.1} parent=0 // pred_check
    _
  $region15: #{model_forward.1} parent=0 // pred_check_branch
    %19 = sbr.rel (0) target = $region17
  $region16: #{model_forward.1} parent=0 // pred_region
    _
  $region17: #{model_forward.1} parent=0 // pred_fallthru
    _
  // Predicated region
  $region18: #{model_forward.1} parent=0 // pred_check
    _
  $region19: #{model_forward.1} parent=0 // pred_check_branch
    %21 = sbr.rel (0) target = $region21
  $region20: #{model_forward.1} parent=0 // pred_region
    _
  $region21: #{model_forward.1} parent=0 // pred_fallthru
    _
  %v22 = vld [vmem:[%s0] sm:$0xff]
  %v23 = vld [vmem:[%s0 + $0x8] sm:$0xff]
  %v24 = vld [vmem:[%s0 + $0x10] sm:$0xff]
  %v25 = vld [vmem:[%s0 + $0x18] sm:$0xff]
  %v26 = vld [vmem:[%s0 + $0x20] sm:$0xff]
  %v27 = vld [vmem:[%s0 + $0x28] sm:$0xff]
  %v28 = vld [vmem:[%s0 + $0x30] sm:$0xff]
  %v29 = vld [vmem:[%s0 + $0x38] sm:$0xff]
  %v30 = vld [vmem:[%s0 + $0x40] sm:$0xff]
  %v31 = vld [vmem:[%s0 + $0x48] sm:$0xff]
  %v32 = vld [vmem:[%s0 + $0x50] sm:$0xff]
  %v33 = vld [vmem:[%s0 + $0x58] sm:$0xff]
  %v34 = vld [vmem:[%s0 + $0x60] sm:$0xff]
  %v35 = vld [vmem:[%s0 + $0x68] sm:$0xff]
  %v36 = vld [vmem:[%s0 + $0x70] sm:$0xff]
  %v37 = vld [vmem:[%s0 + $0x78] sm:$0xff]
  %v38 = vld [vmem:[%s0 + $0x80] sm:$0xff]
  %v39 = vld [vmem:[%s0 + $0x88] sm:$0xff]
  %v40 = vld [vmem:[%s0 + $0x90] sm:$0xff]
  %v41 = vld [vmem:[%s0 + $0x98] sm:$0xff]
  %v42 = vld [vmem:[%s0 + $0xa0] sm:$0xff]
  %v43 = vld [vmem:[%s0 + $0xa8] sm:$0xff]
  %v44 = vld [vmem:[%s0 + $0xb0] sm:$0xff]
  %v45 = vld [vmem:[%s0 + $0xb8] sm:$0xff]
  %v46 = vld [vmem:[%s0 + $0xc0] sm:$0xff]
  %v47 = vld [vmem:[%s0 + $0xc8] sm:$0xff]
  %v48 = vld [vmem:[%s0 + $0xd0] sm:$0xff]
  %v49 = vld [vmem:[%s0 + $0xd8] sm:$0xff]
  %v50 = vld [vmem:[%s0 + $0xe0] sm:$0xff]
  %v51 = vld [vmem:[%s0 + $0xe8] sm:$0xff]
  %v52 = vld [vmem:[%s0 + $0xf0] sm:$0xff]
  %v53 = vld [vmem:[%s0 + $0xf8] sm:$0xff]
  %v54 = vld [vmem:[%s0 + $0x100] sm:$0xff]
  %v55 = vld [vmem:[%s0 + $0x108] sm:$0xff]
  %v56 = vld [vmem:[%s0 + $0x110] sm:$0xff]
  %v57 = vld [vmem:[%s0 + $0x118] sm:$0xff]
  %v58 = vld [vmem:[%s0 + $0x120] sm:$0xff]
  %v59 = vld [vmem:[%s0 + $0x128] sm:$0xff]
  %v60 = vld [vmem:[%s0 + $0x130] sm:$0xff]
  %v61 = vld [vmem:[%s0 + $0x138] sm:$0xff]
  %v62 = vld [vmem:[%s0 + $0x140] sm:$0xff]
  %v63 = vld [vmem:[%s0 + $0x148] sm:$0xff]
  %v64 = vld [vmem:[%s0 + $0x150] sm:$0xff]
  %v65 = vld [vmem:[%s0 + $0x158] sm:$0xff]
  %v66 = vld [vmem:[%s0 + $0x160] sm:$0xff]
  %v67 = vld [vmem:[%s0 + $0x168] sm:$0xff]
  %v68 = vld [vmem:[%s0 + $0x170] sm:$0xff]
  %v69 = vld [vmem:[%s0 + $0x178] sm:$0xff]
  %v70 = vld [vmem:[%s0 + $0x180] sm:$0xff]
  %v71 = vld [vmem:[%s0 + $0x188] sm:$0xff]
  %v72 = vld [vmem:[%s0 + $0x190] sm:$0xff]
  %v73 = vld [vmem:[%s0 + $0x198] sm:$0xff]
  %v74 = vld [vmem:[%s0 + $0x1a0] sm:$0xff]
  %v75 = vld [vmem:[%s0 + $0x1a8] sm:$0xff]
  %v76 = vld [vmem:[%s0 + $0x1b0] sm:$0xff]
  %v77 = vld [vmem:[%s0 + $0x1b8] sm:$0xff]
  %v78 = vld [vmem:[%s0 + $0x1c0] sm:$0xff]
  %v79 = vld [vmem:[%s0 + $0x1c8] sm:$0xff]
  %v80 = vld [vmem:[%s0 + $0x1d0] sm:$0xff]
  %v81 = vld [vmem:[%s0 + $0x1d8] sm:$0xff]
  %v82 = vld [vmem:[%s0 + $0x1e0] sm:$0xff]
  %v83 = vld [vmem:[%s0 + $0x1e8] sm:$0xff]
  %v84 = vld [vmem:[%s0 + $0x1f0] sm:$0xff]
  %v85 = vld [vmem:[%s0 + $0x1f8] sm:$0xff]
  %v86 = vld [vmem:[%s0 + $0x200] sm:$0xff]
  %v87 = vld [vmem:[%s0 + $0x208] sm:$0xff]
  %v88 = vld [vmem:[%s0 + $0x210] sm:$0xff]
  %v89 = vld [vmem:[%s0 + $0x218] sm:$0xff]
  %v90 = vld [vmem:[%s0 + $0x220] sm:$0xff]
  %v91 = vld [vmem:[%s0 + $0x228] sm:$0xff]
  %v92 = vld [vmem:[%s0 + $0x230] sm:$0xff]
  %v93 = vld [vmem:[%s0 + $0x238] sm:$0xff]
  %v94 = vld [vmem:[%s0 + $0x240] sm:$0xff]
  %v95 = vld [vmem:[%s0 + $0x248] sm:$0xff]
  %v96 = vld [vmem:[%s0 + $0x250] sm:$0xff]
  %v97 = vld [vmem:[%s0 + $0x258] sm:$0xff]
  %v98 = vld [vmem:[%s0 + $0x260] sm:$0xff]
  %v99 = vld [vmem:[%s0 + $0x268] sm:$0xff]
  %v100 = vld [vmem:[%s0 + $0x270] sm:$0xff]
  %v101 = vld [vmem:[%s0 + $0x278] sm:$0xff]
  %v102 = vld [vmem:[%s0 + $0x280] sm:$0xff]
  %v103 = vld [vmem:[%s0 + $0x288] sm:$0xff]
  %v104 = vld [vmem:[%s0 + $0x290] sm:$0xff]
  %v105 = vld [vmem:[%s0 + $0x298] sm:$0xff]
  %v106 = vld [vmem:[%s0 + $0x2a0] sm:$0xff]
  %v107 = vld [vmem:[%s0 + $0x2a8] sm:$0xff]
  %v108 = vld [vmem:[%s0 + $0x2b0] sm:$0xff]
  %v109 = vld [vmem:[%s0 + $0x2b8] sm:$0xff]
  %v110 = vld [vmem:[%s0 + $0x2c0] sm:$0xff]
  %v111 = vld [vmem:[%s0 + $0x2c8] sm:$0xff]
  %v112 = vld [vmem:[%s0 + $0x2d0] sm:$0xff]
  %v113 = vld [vmem:[%s0 + $0x2d8] sm:$0xff]
  %v114 = vld [vmem:[%s0 + $0x2e0] sm:$0xff]
  %v115 = vld [vmem:[%s0 + $0x2e8] sm:$0xff]
  %v116 = vld [vmem:[%s0 + $0x2f0] sm:$0xff]
  %v117 = vld [vmem:[%s0 + $0x2f8] sm:$0xff]
  %v118 = vld [vmem:[%s0 + $0x300] sm:$0xff]
  %v119 = vld [vmem:[%s0 + $0x308] sm:$0xff]
  %v120 = vld [vmem:[%s0 + $0x310] sm:$0xff]
  %v121 = vld [vmem:[%s0 + $0x318] sm:$0xff]
  %v122 = vld [vmem:[%s0 + $0x320] sm:$0xff]
  %v123 = vld [vmem:[%s0 + $0x328] sm:$0xff]
  %v124 = vld [vmem:[%s0 + $0x330] sm:$0xff]
  %v125 = vld [vmem:[%s0 + $0x338] sm:$0xff]
  %v126 = vld [vmem:[%s0 + $0x340] sm:$0xff]
  %v127 = vld [vmem:[%s0 + $0x348] sm:$0xff]
  %v128 = vld [vmem:[%s0 + $0x350] sm:$0xff]
  %v129 = vld [vmem:[%s0 + $0x358] sm:$0xff]
  %v130 = vld [vmem:[%s0 + $0x360] sm:$0xff]
  %v131 = vld [vmem:[%s0 + $0x368] sm:$0xff]
  %v132 = vld [vmem:[%s0 + $0x370] sm:$0xff]
  %v133 = vld [vmem:[%s0 + $0x378] sm:$0xff]
  %v134 = vld [vmem:[%s0 + $0x380] sm:$0xff]
  %v135 = vld [vmem:[%s0 + $0x388] sm:$0xff]
  %v136 = vld [vmem:[%s0 + $0x390] sm:$0xff]
  %v137 = vld [vmem:[%s0 + $0x398] sm:$0xff]
  %v138 = vld [vmem:[%s0 + $0x3a0] sm:$0xff]
  %v139 = vld [vmem:[%s0 + $0x3a8] sm:$0xff]
  %v140 = vld [vmem:[%s0 + $0x3b0] sm:$0xff]
  %v141 = vld [vmem:[%s0 + $0x3b8] sm:$0xff]
  %v142 = vld [vmem:[%s0 + $0x3c0] sm:$0xff]
  %v143 = vld [vmem:[%s0 + $0x3c8] sm:$0xff]
  %v144 = vld [vmem:[%s0 + $0x3d0] sm:$0xff]
  %v145 = vld [vmem:[%s0 + $0x3d8] sm:$0xff]
  %v146 = vld [vmem:[%s0 + $0x3e0] sm:$0xff]
  %v147 = vld [vmem:[%s0 + $0x3e8] sm:$0xff]
  %v148 = vld [vmem:[%s0 + $0x3f0] sm:$0xff]
  %v149 = vld [vmem:[%s0 + $0x3f8] sm:$0xff]
  %v150 = vld [vmem:[%s1] sm:$0xff]
  %v151 = vld [vmem:[%s1 + $0x8] sm:$0xff]
  %v152 = vld [vmem:[%s1 + $0x10] sm:$0xff]
  %v153 = vld [vmem:[%s1 + $0x18] sm:$0xff]
  %v154 = vld [vmem:[%s1 + $0x20] sm:$0xff]
  %v155 = vld [vmem:[%s1 + $0x28] sm:$0xff]
  %v156 = vld [vmem:[%s1 + $0x30] sm:$0xff]
  %v157 = vld [vmem:[%s1 + $0x38] sm:$0xff]
  %v158 = vld [vmem:[%s1 + $0x40] sm:$0xff]
  %v159 = vld [vmem:[%s1 + $0x48] sm:$0xff]
  %v160 = vld [vmem:[%s1 + $0x50] sm:$0xff]
  %v161 = vld [vmem:[%s1 + $0x58] sm:$0xff]
  %v162 = vld [vmem:[%s1 + $0x60] sm:$0xff]
  %v163 = vld [vmem:[%s1 + $0x68] sm:$0xff]
  %v164 = vld [vmem:[%s1 + $0x70] sm:$0xff]
  %v165 = vld [vmem:[%s1 + $0x78] sm:$0xff]
  %v166 = vld [vmem:[%s1 + $0x80] sm:$0xff]
  %v167 = vld [vmem:[%s1 + $0x88] sm:$0xff]
  %v168 = vld [vmem:[%s1 + $0x90] sm:$0xff]
  %v169 = vld [vmem:[%s1 + $0x98] sm:$0xff]
  %v170 = vld [vmem:[%s1 + $0xa0] sm:$0xff]
  %v171 = vld [vmem:[%s1 + $0xa8] sm:$0xff]
  %v172 = vld [vmem:[%s1 + $0xb0] sm:$0xff]
  %v173 = vld [vmem:[%s1 + $0xb8] sm:$0xff]
  %v174 = vld [vmem:[%s1 + $0xc0] sm:$0xff]
  %v175 = vld [vmem:[%s1 + $0xc8] sm:$0xff]
  %v176 = vld [vmem:[%s1 + $0xd0] sm:$0xff]
  %v177 = vld [vmem:[%s1 + $0xd8] sm:$0xff]
  %v178 = vld [vmem:[%s1 + $0xe0] sm:$0xff]
  %v179 = vld [vmem:[%s1 + $0xe8] sm:$0xff]
  %v180 = vld [vmem:[%s1 + $0xf0] sm:$0xff]
  %v181 = vld [vmem:[%s1 + $0xf8] sm:$0xff]
  %v182 = vld [vmem:[%s1 + $0x100] sm:$0xff]
  %v183 = vld [vmem:[%s1 + $0x108] sm:$0xff]
  %v184 = vld [vmem:[%s1 + $0x110] sm:$0xff]
  %v185 = vld [vmem:[%s1 + $0x118] sm:$0xff]
  %v186 = vld [vmem:[%s1 + $0x120] sm:$0xff]
  %v187 = vld [vmem:[%s1 + $0x128] sm:$0xff]
  %v188 = vld [vmem:[%s1 + $0x130] sm:$0xff]
  %v189 = vld [vmem:[%s1 + $0x138] sm:$0xff]
  %v190 = vld [vmem:[%s1 + $0x140] sm:$0xff]
  %v191 = vld [vmem:[%s1 + $0x148] sm:$0xff]
  %v192 = vld [vmem:[%s1 + $0x150] sm:$0xff]
  %v193 = vld [vmem:[%s1 + $0x158] sm:$0xff]
  %v194 = vld [vmem:[%s1 + $0x160] sm:$0xff]
  %v195 = vld [vmem:[%s1 + $0x168] sm:$0xff]
  %v196 = vld [vmem:[%s1 + $0x170] sm:$0xff]
  %v197 = vld [vmem:[%s1 + $0x178] sm:$0xff]
  %v198 = vld [vmem:[%s1 + $0x180] sm:$0xff]
  %v199 = vld [vmem:[%s1 + $0x188] sm:$0xff]
  %v200 = vld [vmem:[%s1 + $0x190] sm:$0xff]
  %v201 = vld [vmem:[%s1 + $0x198] sm:$0xff]
  %v202 = vld [vmem:[%s1 + $0x1a0] sm:$0xff]
  %v203 = vld [vmem:[%s1 + $0x1a8] sm:$0xff]
  %v204 = vld [vmem:[%s1 + $0x1b0] sm:$0xff]
  %v205 = vld [vmem:[%s1 + $0x1b8] sm:$0xff]
  %v206 = vld [vmem:[%s1 + $0x1c0] sm:$0xff]
  %v207 = vld [vmem:[%s1 + $0x1c8] sm:$0xff]
  %v208 = vld [vmem:[%s1 + $0x1d0] sm:$0xff]
  %v209 = vld [vmem:[%s1 + $0x1d8] sm:$0xff]
  %v210 = vld [vmem:[%s1 + $0x1e0] sm:$0xff]
  %v211 = vld [vmem:[%s1 + $0x1e8] sm:$0xff]
  %v212 = vld [vmem:[%s1 + $0x1f0] sm:$0xff]
  %v213 = vld [vmem:[%s1 + $0x1f8] sm:$0xff]
  %v214 = vld [vmem:[%s1 + $0x200] sm:$0xff]
  %v215 = vld [vmem:[%s1 + $0x208] sm:$0xff]
  %v216 = vld [vmem:[%s1 + $0x210] sm:$0xff]
  %v217 = vld [vmem:[%s1 + $0x218] sm:$0xff]
  %v218 = vld [vmem:[%s1 + $0x220] sm:$0xff]
  %v219 = vld [vmem:[%s1 + $0x228] sm:$0xff]
  %v220 = vld [vmem:[%s1 + $0x230] sm:$0xff]
  %v221 = vld [vmem:[%s1 + $0x238] sm:$0xff]
  %v222 = vld [vmem:[%s1 + $0x240] sm:$0xff]
  %v223 = vld [vmem:[%s1 + $0x248] sm:$0xff]
  %v224 = vld [vmem:[%s1 + $0x250] sm:$0xff]
  %v225 = vld [vmem:[%s1 + $0x258] sm:$0xff]
  %v226 = vld [vmem:[%s1 + $0x260] sm:$0xff]
  %v227 = vld [vmem:[%s1 + $0x268] sm:$0xff]
  %v228 = vld [vmem:[%s1 + $0x270] sm:$0xff]
  %v229 = vld [vmem:[%s1 + $0x278] sm:$0xff]
  %v230 = vld [vmem:[%s1 + $0x280] sm:$0xff]
  %v231 = vld [vmem:[%s1 + $0x288] sm:$0xff]
  %v232 = vld [vmem:[%s1 + $0x290] sm:$0xff]
  %v233 = vld [vmem:[%s1 + $0x298] sm:$0xff]
  %v234 = vld [vmem:[%s1 + $0x2a0] sm:$0xff]
  %v235 = vld [vmem:[%s1 + $0x2a8] sm:$0xff]
  %v236 = vld [vmem:[%s1 + $0x2b0] sm:$0xff]
  %v237 = vld [vmem:[%s1 + $0x2b8] sm:$0xff]
  %v238 = vld [vmem:[%s1 + $0x2c0] sm:$0xff]
  %v239 = vld [vmem:[%s1 + $0x2c8] sm:$0xff]
  %v240 = vld [vmem:[%s1 + $0x2d0] sm:$0xff]
  %v241 = vld [vmem:[%s1 + $0x2d8] sm:$0xff]
  %v242 = vld [vmem:[%s1 + $0x2e0] sm:$0xff]
  %v243 = vld [vmem:[%s1 + $0x2e8] sm:$0xff]
  %v244 = vld [vmem:[%s1 + $0x2f0] sm:$0xff]
  %v245 = vld [vmem:[%s1 + $0x2f8] sm:$0xff]
  %v246 = vld [vmem:[%s1 + $0x300] sm:$0xff]
  %v247 = vld [vmem:[%s1 + $0x308] sm:$0xff]
  %v248 = vld [vmem:[%s1 + $0x310] sm:$0xff]
  %v249 = vld [vmem:[%s1 + $0x318] sm:$0xff]
  %v250 = vld [vmem:[%s1 + $0x320] sm:$0xff]
  %v251 = vld [vmem:[%s1 + $0x328] sm:$0xff]
  %v252 = vld [vmem:[%s1 + $0x330] sm:$0xff]
  %v253 = vld [vmem:[%s1 + $0x338] sm:$0xff]
  %v254 = vld [vmem:[%s1 + $0x340] sm:$0xff]
  %v255 = vld [vmem:[%s1 + $0x348] sm:$0xff]
  %v256 = vld [vmem:[%s1 + $0x350] sm:$0xff]
  %v257 = vld [vmem:[%s1 + $0x358] sm:$0xff]
  %v258 = vld [vmem:[%s1 + $0x360] sm:$0xff]
  %v259 = vld [vmem:[%s1 + $0x368] sm:$0xff]
  %v260 = vld [vmem:[%s1 + $0x370] sm:$0xff]
  %v261 = vld [vmem:[%s1 + $0x378] sm:$0xff]
  %v262 = vld [vmem:[%s1 + $0x380] sm:$0xff]
  %v263 = vld [vmem:[%s1 + $0x388] sm:$0xff]
  %v264 = vld [vmem:[%s1 + $0x390] sm:$0xff]
  %v265 = vld [vmem:[%s1 + $0x398] sm:$0xff]
  %v266 = vld [vmem:[%s1 + $0x3a0] sm:$0xff]
  %v267 = vld [vmem:[%s1 + $0x3a8] sm:$0xff]
  %v268 = vld [vmem:[%s1 + $0x3b0] sm:$0xff]
  %v269 = vld [vmem:[%s1 + $0x3b8] sm:$0xff]
  %v270 = vld [vmem:[%s2] sm:$0x1]
  %v272 = vperm.slane %v270, 0
  %vm274 = vcmask 523264
  %v276 = vsel %vm274, %v29, 0
  %v279 = vsel %vm274, %v37, 0
  %v282 = vsel %vm274, %v45, 0
  %v285 = vsel %vm274, %v53, 0
  %v288 = vsel %vm274, %v61, 0
  %v291 = vsel %vm274, %v69, 0
  %v294 = vsel %vm274, %v77, 0
  %v297 = vsel %vm274, %v85, 0
  %v300 = vsel %vm274, %v93, 0
  %v303 = vsel %vm274, %v101, 0
  %v306 = vsel %vm274, %v109, 0
  %v309 = vsel %vm274, %v117, 0
  %v312 = vsel %vm274, %v125, 0
  %v315 = vsel %vm274, %v133, 0
  %v318 = vsel %vm274, %v141, 0
  %v321 = vsel %vm274, %v149, 0
  %323 = vmatpush.msra.mxu0 %v165
  %324 = vmatpush.msra.mxu0 %v164
  %325 = vmatpush.msra.mxu0 %v163
  %326 = vmatpush.msra.mxu0 %v162
  %327 = vmatpush.msra.mxu0 %v161
  %328 = vmatpush.msra.mxu0 %v160
  %329 = vmatpush.msra.mxu0 %v159
  %330 = vmatpush.msra.mxu0 %v158
  %331 = vmatpush.msra.mxu0 %v157
  %332 = vmatpush.msra.mxu0 %v156
  %333 = vmatpush.msra.mxu0 %v155
  %334 = vmatpush.msra.mxu0 %v154
  %335 = vmatpush.msra.mxu0 %v153
  %336 = vmatpush.msra.mxu0 %v152
  %337 = vmatpush.msra.mxu0 %v151
  %338 = vmatpush.msra.mxu0 %v150
  %339 = vmatmul.f32.gmra.mxu0 %v22
  %v340 = vpop.f32.mrf.mxu0
  %v341 = vadd.f32 %v272, %v340
  %342 = vmatmul.f32.gmra.mxu0 %v30
  %v343 = vpop.f32.mrf.mxu0
  %v344 = vadd.f32 %v272, %v343
  %345 = vmatmul.f32.gmra.mxu0 %v38
  %v346 = vpop.f32.mrf.mxu0
  %v347 = vadd.f32 %v272, %v346
  %348 = vmatmul.f32.gmra.mxu0 %v46
  %v349 = vpop.f32.mrf.mxu0
  %v350 = vadd.f32 %v272, %v349
  %351 = vmatmul.f32.gmra.mxu0 %v54
  %v352 = vpop.f32.mrf.mxu0
  %v353 = vadd.f32 %v272, %v352
  %354 = vmatmul.f32.gmra.mxu0 %v62
  %v355 = vpop.f32.mrf.mxu0
  %v356 = vadd.f32 %v272, %v355
  %357 = vmatmul.f32.gmra.mxu0 %v70
  %v358 = vpop.f32.mrf.mxu0
  %v359 = vadd.f32 %v272, %v358
  %360 = vmatmul.f32.gmra.mxu0 %v78
  %v361 = vpop.f32.mrf.mxu0
  %v362 = vadd.f32 %v272, %v361
  %363 = vmatmul.f32.gmra.mxu0 %v86
  %v364 = vpop.f32.mrf.mxu0
  %v365 = vadd.f32 %v272, %v364
  %366 = vmatmul.f32.gmra.mxu0 %v94
  %v367 = vpop.f32.mrf.mxu0
  %v368 = vadd.f32 %v272, %v367
  %369 = vmatmul.f32.gmra.mxu0 %v102
  %v370 = vpop.f32.mrf.mxu0
  %v371 = vadd.f32 %v272, %v370
  %372 = vmatmul.f32.gmra.mxu0 %v110
  %v373 = vpop.f32.mrf.mxu0
  %v374 = vadd.f32 %v272, %v373
  %375 = vmatmul.f32.gmra.mxu0 %v118
  %v376 = vpop.f32.mrf.mxu0
  %v377 = vadd.f32 %v272, %v376
  %378 = vmatmul.f32.gmra.mxu0 %v126
  %v379 = vpop.f32.mrf.mxu0
  %v380 = vadd.f32 %v272, %v379
  %381 = vmatmul.f32.gmra.mxu0 %v134
  %v382 = vpop.f32.mrf.mxu0
  %v383 = vadd.f32 %v272, %v382
  %384 = vmatmul.f32.gmra.mxu0 %v142
  %v385 = vpop.f32.mrf.mxu0
  %v386 = vadd.f32 %v272, %v385
  %387 = vdwg.mxu0
  %388 = vmatpush.msra.mxu0 %v181
  %389 = vmatpush.msra.mxu0 %v180
  %390 = vmatpush.msra.mxu0 %v179
  %391 = vmatpush.msra.mxu0 %v178
  %392 = vmatpush.msra.mxu0 %v177
  %393 = vmatpush.msra.mxu0 %v176
  %394 = vmatpush.msra.mxu0 %v175
  %395 = vmatpush.msra.mxu0 %v174
  %396 = vmatpush.msra.mxu0 %v173
  %397 = vmatpush.msra.mxu0 %v172
  %398 = vmatpush.msra.mxu0 %v171
  %399 = vmatpush.msra.mxu0 %v170
  %400 = vmatpush.msra.mxu0 %v169
  %401 = vmatpush.msra.mxu0 %v168
  %402 = vmatpush.msra.mxu0 %v167
  %403 = vmatpush.msra.mxu0 %v166
  %404 = vmatmul.f32.gmra.mxu0 %v23
  %v405 = vpop.f32.mrf.mxu0
  %v406 = vadd.f32 %v341, %v405
  %407 = vmatmul.f32.gmra.mxu0 %v31
  %v408 = vpop.f32.mrf.mxu0
  %v409 = vadd.f32 %v344, %v408
  %410 = vmatmul.f32.gmra.mxu0 %v39
  %v411 = vpop.f32.mrf.mxu0
  %v412 = vadd.f32 %v347, %v411
  %413 = vmatmul.f32.gmra.mxu0 %v47
  %v414 = vpop.f32.mrf.mxu0
  %v415 = vadd.f32 %v350, %v414
  %416 = vmatmul.f32.gmra.mxu0 %v55
  %v417 = vpop.f32.mrf.mxu0
  %v418 = vadd.f32 %v353, %v417
  %419 = vmatmul.f32.gmra.mxu0 %v63
  %v420 = vpop.f32.mrf.mxu0
  %v421 = vadd.f32 %v356, %v420
  %422 = vmatmul.f32.gmra.mxu0 %v71
  %v423 = vpop.f32.mrf.mxu0
  %v424 = vadd.f32 %v359, %v423
  %425 = vmatmul.f32.gmra.mxu0 %v79
  %v426 = vpop.f32.mrf.mxu0
  %v427 = vadd.f32 %v362, %v426
  %428 = vmatmul.f32.gmra.mxu0 %v87
  %v429 = vpop.f32.mrf.mxu0
  %v430 = vadd.f32 %v365, %v429
  %431 = vmatmul.f32.gmra.mxu0 %v95
  %v432 = vpop.f32.mrf.mxu0
  %v433 = vadd.f32 %v368, %v432
  %434 = vmatmul.f32.gmra.mxu0 %v103
  %v435 = vpop.f32.mrf.mxu0
  %v436 = vadd.f32 %v371, %v435
  %437 = vmatmul.f32.gmra.mxu0 %v111
  %v438 = vpop.f32.mrf.mxu0
  %v439 = vadd.f32 %v374, %v438
  %440 = vmatmul.f32.gmra.mxu0 %v119
  %v441 = vpop.f32.mrf.mxu0
  %v442 = vadd.f32 %v377, %v441
  %443 = vmatmul.f32.gmra.mxu0 %v127
  %v444 = vpop.f32.mrf.mxu0
  %v445 = vadd.f32 %v380, %v444
  %446 = vmatmul.f32.gmra.mxu0 %v135
  %v447 = vpop.f32.mrf.mxu0
  %v448 = vadd.f32 %v383, %v447
  %449 = vmatmul.f32.gmra.mxu0 %v143
  %v450 = vpop.f32.mrf.mxu0
  %v451 = vadd.f32 %v386, %v450
  %452 = vdwg.mxu0
  %453 = vmatpush.msra.mxu0 %v197
  %454 = vmatpush.msra.mxu0 %v196
  %455 = vmatpush.msra.mxu0 %v195
  %456 = vmatpush.msra.mxu0 %v194
  %457 = vmatpush.msra.mxu0 %v193
  %458 = vmatpush.msra.mxu0 %v192
  %459 = vmatpush.msra.mxu0 %v191
  %460 = vmatpush.msra.mxu0 %v190
  %461 = vmatpush.msra.mxu0 %v189
  %462 = vmatpush.msra.mxu0 %v188
  %463 = vmatpush.msra.mxu0 %v187
  %464 = vmatpush.msra.mxu0 %v186
  %465 = vmatpush.msra.mxu0 %v185
  %466 = vmatpush.msra.mxu0 %v184
  %467 = vmatpush.msra.mxu0 %v183
  %468 = vmatpush.msra.mxu0 %v182
  %469 = vmatmul.f32.gmra.mxu0 %v24
  %v470 = vpop.f32.mrf.mxu0
  %v471 = vadd.f32 %v406, %v470
  %472 = vmatmul.f32.gmra.mxu0 %v32
  %v473 = vpop.f32.mrf.mxu0
  %v474 = vadd.f32 %v409, %v473
  %475 = vmatmul.f32.gmra.mxu0 %v40
  %v476 = vpop.f32.mrf.mxu0
  %v477 = vadd.f32 %v412, %v476
  %478 = vmatmul.f32.gmra.mxu0 %v48
  %v479 = vpop.f32.mrf.mxu0
  %v480 = vadd.f32 %v415, %v479
  %481 = vmatmul.f32.gmra.mxu0 %v56
  %v482 = vpop.f32.mrf.mxu0
  %v483 = vadd.f32 %v418, %v482
  %484 = vmatmul.f32.gmra.mxu0 %v64
  %v485 = vpop.f32.mrf.mxu0
  %v486 = vadd.f32 %v421, %v485
  %487 = vmatmul.f32.gmra.mxu0 %v72
  %v488 = vpop.f32.mrf.mxu0
  %v489 = vadd.f32 %v424, %v488
  %490 = vmatmul.f32.gmra.mxu0 %v80
  %v491 = vpop.f32.mrf.mxu0
  %v492 = vadd.f32 %v427, %v491
  %493 = vmatmul.f32.gmra.mxu0 %v88
  %v494 = vpop.f32.mrf.mxu0
  %v495 = vadd.f32 %v430, %v494
  %496 = vmatmul.f32.gmra.mxu0 %v96
  %v497 = vpop.f32.mrf.mxu0
  %v498 = vadd.f32 %v433, %v497
  %499 = vmatmul.f32.gmra.mxu0 %v104
  %v500 = vpop.f32.mrf.mxu0
  %v501 = vadd.f32 %v436, %v500
  %502 = vmatmul.f32.gmra.mxu0 %v112
  %v503 = vpop.f32.mrf.mxu0
  %v504 = vadd.f32 %v439, %v503
  %505 = vmatmul.f32.gmra.mxu0 %v120
  %v506 = vpop.f32.mrf.mxu0
  %v507 = vadd.f32 %v442, %v506
  %508 = vmatmul.f32.gmra.mxu0 %v128
  %v509 = vpop.f32.mrf.mxu0
  %v510 = vadd.f32 %v445, %v509
  %511 = vmatmul.f32.gmra.mxu0 %v136
  %v512 = vpop.f32.mrf.mxu0
  %v513 = vadd.f32 %v448, %v512
  %514 = vmatmul.f32.gmra.mxu0 %v144
  %v515 = vpop.f32.mrf.mxu0
  %v516 = vadd.f32 %v451, %v515
  %517 = vdwg.mxu0
  %518 = vmatpush.msra.mxu0 %v213
  %519 = vmatpush.msra.mxu0 %v212
  %520 = vmatpush.msra.mxu0 %v211
  %521 = vmatpush.msra.mxu0 %v210
  %522 = vmatpush.msra.mxu0 %v209
  %523 = vmatpush.msra.mxu0 %v208
  %524 = vmatpush.msra.mxu0 %v207
  %525 = vmatpush.msra.mxu0 %v206
  %526 = vmatpush.msra.mxu0 %v205
  %527 = vmatpush.msra.mxu0 %v204
  %528 = vmatpush.msra.mxu0 %v203
  %529 = vmatpush.msra.mxu0 %v202
  %530 = vmatpush.msra.mxu0 %v201
  %531 = vmatpush.msra.mxu0 %v200
  %532 = vmatpush.msra.mxu0 %v199
  %533 = vmatpush.msra.mxu0 %v198
  %534 = vmatmul.f32.gmra.mxu0 %v25
  %v535 = vpop.f32.mrf.mxu0
  %v536 = vadd.f32 %v471, %v535
  %537 = vmatmul.f32.gmra.mxu0 %v33
  %v538 = vpop.f32.mrf.mxu0
  %v539 = vadd.f32 %v474, %v538
  %540 = vmatmul.f32.gmra.mxu0 %v41
  %v541 = vpop.f32.mrf.mxu0
  %v542 = vadd.f32 %v477, %v541
  %543 = vmatmul.f32.gmra.mxu0 %v49
  %v544 = vpop.f32.mrf.mxu0
  %v545 = vadd.f32 %v480, %v544
  %546 = vmatmul.f32.gmra.mxu0 %v57
  %v547 = vpop.f32.mrf.mxu0
  %v548 = vadd.f32 %v483, %v547
  %549 = vmatmul.f32.gmra.mxu0 %v65
  %v550 = vpop.f32.mrf.mxu0
  %v551 = vadd.f32 %v486, %v550
  %552 = vmatmul.f32.gmra.mxu0 %v73
  %v553 = vpop.f32.mrf.mxu0
  %v554 = vadd.f32 %v489, %v553
  %555 = vmatmul.f32.gmra.mxu0 %v81
  %v556 = vpop.f32.mrf.mxu0
  %v557 = vadd.f32 %v492, %v556
  %558 = vmatmul.f32.gmra.mxu0 %v89
  %v559 = vpop.f32.mrf.mxu0
  %v560 = vadd.f32 %v495, %v559
  %561 = vmatmul.f32.gmra.mxu0 %v97
  %v562 = vpop.f32.mrf.mxu0
  %v563 = vadd.f32 %v498, %v562
  %564 = vmatmul.f32.gmra.mxu0 %v105
  %v565 = vpop.f32.mrf.mxu0
  %v566 = vadd.f32 %v501, %v565
  %567 = vmatmul.f32.gmra.mxu0 %v113
  %v568 = vpop.f32.mrf.mxu0
  %v569 = vadd.f32 %v504, %v568
  %570 = vmatmul.f32.gmra.mxu0 %v121
  %v571 = vpop.f32.mrf.mxu0
  %v572 = vadd.f32 %v507, %v571
  %573 = vmatmul.f32.gmra.mxu0 %v129
  %v574 = vpop.f32.mrf.mxu0
  %v575 = vadd.f32 %v510, %v574
  %576 = vmatmul.f32.gmra.mxu0 %v137
  %v577 = vpop.f32.mrf.mxu0
  %v578 = vadd.f32 %v513, %v577
  %579 = vmatmul.f32.gmra.mxu0 %v145
  %v580 = vpop.f32.mrf.mxu0
  %v581 = vadd.f32 %v516, %v580
  %582 = vdwg.mxu0
  %583 = vmatpush.msra.mxu0 %v229
  %584 = vmatpush.msra.mxu0 %v228
  %585 = vmatpush.msra.mxu0 %v227
  %586 = vmatpush.msra.mxu0 %v226
  %587 = vmatpush.msra.mxu0 %v225
  %588 = vmatpush.msra.mxu0 %v224
  %589 = vmatpush.msra.mxu0 %v223
  %590 = vmatpush.msra.mxu0 %v222
  %591 = vmatpush.msra.mxu0 %v221
  %592 = vmatpush.msra.mxu0 %v220
  %593 = vmatpush.msra.mxu0 %v219
  %594 = vmatpush.msra.mxu0 %v218
  %595 = vmatpush.msra.mxu0 %v217
  %596 = vmatpush.msra.mxu0 %v216
  %597 = vmatpush.msra.mxu0 %v215
  %598 = vmatpush.msra.mxu0 %v214
  %599 = vmatmul.f32.gmra.mxu0 %v26
  %v600 = vpop.f32.mrf.mxu0
  %v601 = vadd.f32 %v536, %v600
  %602 = vmatmul.f32.gmra.mxu0 %v34
  %v603 = vpop.f32.mrf.mxu0
  %v604 = vadd.f32 %v539, %v603
  %605 = vmatmul.f32.gmra.mxu0 %v42
  %v606 = vpop.f32.mrf.mxu0
  %v607 = vadd.f32 %v542, %v606
  %608 = vmatmul.f32.gmra.mxu0 %v50
  %v609 = vpop.f32.mrf.mxu0
  %v610 = vadd.f32 %v545, %v609
  %611 = vmatmul.f32.gmra.mxu0 %v58
  %v612 = vpop.f32.mrf.mxu0
  %v613 = vadd.f32 %v548, %v612
  %614 = vmatmul.f32.gmra.mxu0 %v66
  %v615 = vpop.f32.mrf.mxu0
  %v616 = vadd.f32 %v551, %v615
  %617 = vmatmul.f32.gmra.mxu0 %v74
  %v618 = vpop.f32.mrf.mxu0
  %v619 = vadd.f32 %v554, %v618
  %620 = vmatmul.f32.gmra.mxu0 %v82
  %v621 = vpop.f32.mrf.mxu0
  %v622 = vadd.f32 %v557, %v621
  %623 = vmatmul.f32.gmra.mxu0 %v90
  %v624 = vpop.f32.mrf.mxu0
  %v625 = vadd.f32 %v560, %v624
  %626 = vmatmul.f32.gmra.mxu0 %v98
  %v627 = vpop.f32.mrf.mxu0
  %v628 = vadd.f32 %v563, %v627
  %629 = vmatmul.f32.gmra.mxu0 %v106
  %v630 = vpop.f32.mrf.mxu0
  %v631 = vadd.f32 %v566, %v630
  %632 = vmatmul.f32.gmra.mxu0 %v114
  %v633 = vpop.f32.mrf.mxu0
  %v634 = vadd.f32 %v569, %v633
  %635 = vmatmul.f32.gmra.mxu0 %v122
  %v636 = vpop.f32.mrf.mxu0
  %v637 = vadd.f32 %v572, %v636
  %638 = vmatmul.f32.gmra.mxu0 %v130
  %v639 = vpop.f32.mrf.mxu0
  %v640 = vadd.f32 %v575, %v639
  %641 = vmatmul.f32.gmra.mxu0 %v138
  %v642 = vpop.f32.mrf.mxu0
  %v643 = vadd.f32 %v578, %v642
  %644 = vmatmul.f32.gmra.mxu0 %v146
  %v645 = vpop.f32.mrf.mxu0
  %v646 = vadd.f32 %v581, %v645
  %647 = vdwg.mxu0
  %648 = vmatpush.msra.mxu0 %v245
  %649 = vmatpush.msra.mxu0 %v244
  %650 = vmatpush.msra.mxu0 %v243
  %651 = vmatpush.msra.mxu0 %v242
  %652 = vmatpush.msra.mxu0 %v241
  %653 = vmatpush.msra.mxu0 %v240
  %654 = vmatpush.msra.mxu0 %v239
  %655 = vmatpush.msra.mxu0 %v238
  %656 = vmatpush.msra.mxu0 %v237
  %657 = vmatpush.msra.mxu0 %v236
  %658 = vmatpush.msra.mxu0 %v235
  %659 = vmatpush.msra.mxu0 %v234
  %660 = vmatpush.msra.mxu0 %v233
  %661 = vmatpush.msra.mxu0 %v232
  %662 = vmatpush.msra.mxu0 %v231
  %663 = vmatpush.msra.mxu0 %v230
  %664 = vmatmul.f32.gmra.mxu0 %v27
  %v665 = vpop.f32.mrf.mxu0
  %v666 = vadd.f32 %v601, %v665
  %667 = vmatmul.f32.gmra.mxu0 %v35
  %v668 = vpop.f32.mrf.mxu0
  %v669 = vadd.f32 %v604, %v668
  %670 = vmatmul.f32.gmra.mxu0 %v43
  %v671 = vpop.f32.mrf.mxu0
  %v672 = vadd.f32 %v607, %v671
  %673 = vmatmul.f32.gmra.mxu0 %v51
  %v674 = vpop.f32.mrf.mxu0
  %v675 = vadd.f32 %v610, %v674
  %676 = vmatmul.f32.gmra.mxu0 %v59
  %v677 = vpop.f32.mrf.mxu0
  %v678 = vadd.f32 %v613, %v677
  %679 = vmatmul.f32.gmra.mxu0 %v67
  %v680 = vpop.f32.mrf.mxu0
  %v681 = vadd.f32 %v616, %v680
  %682 = vmatmul.f32.gmra.mxu0 %v75
  %v683 = vpop.f32.mrf.mxu0
  %v684 = vadd.f32 %v619, %v683
  %685 = vmatmul.f32.gmra.mxu0 %v83
  %v686 = vpop.f32.mrf.mxu0
  %v687 = vadd.f32 %v622, %v686
  %688 = vmatmul.f32.gmra.mxu0 %v91
  %v689 = vpop.f32.mrf.mxu0
  %v690 = vadd.f32 %v625, %v689
  %691 = vmatmul.f32.gmra.mxu0 %v99
  %v692 = vpop.f32.mrf.mxu0
  %v693 = vadd.f32 %v628, %v692
  %694 = vmatmul.f32.gmra.mxu0 %v107
  %v695 = vpop.f32.mrf.mxu0
  %v696 = vadd.f32 %v631, %v695
  %697 = vmatmul.f32.gmra.mxu0 %v115
  %v698 = vpop.f32.mrf.mxu0
  %v699 = vadd.f32 %v634, %v698
  %700 = vmatmul.f32.gmra.mxu0 %v123
  %v701 = vpop.f32.mrf.mxu0
  %v702 = vadd.f32 %v637, %v701
  %703 = vmatmul.f32.gmra.mxu0 %v131
  %v704 = vpop.f32.mrf.mxu0
  %v705 = vadd.f32 %v640, %v704
  %706 = vmatmul.f32.gmra.mxu0 %v139
  %v707 = vpop.f32.mrf.mxu0
  %v708 = vadd.f32 %v643, %v707
  %709 = vmatmul.f32.gmra.mxu0 %v147
  %v710 = vpop.f32.mrf.mxu0
  %v711 = vadd.f32 %v646, %v710
  %712 = vdwg.mxu0
  %713 = vmatpush.msra.mxu0 %v261
  %714 = vmatpush.msra.mxu0 %v260
  %715 = vmatpush.msra.mxu0 %v259
  %716 = vmatpush.msra.mxu0 %v258
  %717 = vmatpush.msra.mxu0 %v257
  %718 = vmatpush.msra.mxu0 %v256
  %719 = vmatpush.msra.mxu0 %v255
  %720 = vmatpush.msra.mxu0 %v254
  %721 = vmatpush.msra.mxu0 %v253
  %722 = vmatpush.msra.mxu0 %v252
  %723 = vmatpush.msra.mxu0 %v251
  %724 = vmatpush.msra.mxu0 %v250
  %725 = vmatpush.msra.mxu0 %v249
  %726 = vmatpush.msra.mxu0 %v248
  %727 = vmatpush.msra.mxu0 %v247
  %728 = vmatpush.msra.mxu0 %v246
  %729 = vmatmul.f32.gmra.mxu0 %v28
  %v730 = vpop.f32.mrf.mxu0
  %v731 = vadd.f32 %v666, %v730
  %732 = vmatmul.f32.gmra.mxu0 %v36
  %v733 = vpop.f32.mrf.mxu0
  %v734 = vadd.f32 %v669, %v733
  %735 = vmatmul.f32.gmra.mxu0 %v44
  %v736 = vpop.f32.mrf.mxu0
  %v737 = vadd.f32 %v672, %v736
  %738 = vmatmul.f32.gmra.mxu0 %v52
  %v739 = vpop.f32.mrf.mxu0
  %v740 = vadd.f32 %v675, %v739
  %741 = vmatmul.f32.gmra.mxu0 %v60
  %v742 = vpop.f32.mrf.mxu0
  %v743 = vadd.f32 %v678, %v742
  %744 = vmatmul.f32.gmra.mxu0 %v68
  %v745 = vpop.f32.mrf.mxu0
  %v746 = vadd.f32 %v681, %v745
  %747 = vmatmul.f32.gmra.mxu0 %v76
  %v748 = vpop.f32.mrf.mxu0
  %v749 = vadd.f32 %v684, %v748
  %750 = vmatmul.f32.gmra.mxu0 %v84
  %v751 = vpop.f32.mrf.mxu0
  %v752 = vadd.f32 %v687, %v751
  %753 = vmatmul.f32.gmra.mxu0 %v92
  %v754 = vpop.f32.mrf.mxu0
  %v755 = vadd.f32 %v690, %v754
  %756 = vmatmul.f32.gmra.mxu0 %v100
  %v757 = vpop.f32.mrf.mxu0
  %v758 = vadd.f32 %v693, %v757
  %759 = vmatmul.f32.gmra.mxu0 %v108
  %v760 = vpop.f32.mrf.mxu0
  %v761 = vadd.f32 %v696, %v760
  %762 = vmatmul.f32.gmra.mxu0 %v116
  %v763 = vpop.f32.mrf.mxu0
  %v764 = vadd.f32 %v699, %v763
  %765 = vmatmul.f32.gmra.mxu0 %v124
  %v766 = vpop.f32.mrf.mxu0
  %v767 = vadd.f32 %v702, %v766
  %768 = vmatmul.f32.gmra.mxu0 %v132
  %v769 = vpop.f32.mrf.mxu0
  %v770 = vadd.f32 %v705, %v769
  %771 = vmatmul.f32.gmra.mxu0 %v140
  %v772 = vpop.f32.mrf.mxu0
  %v773 = vadd.f32 %v708, %v772
  %774 = vmatmul.f32.gmra.mxu0 %v148
  %v775 = vpop.f32.mrf.mxu0
  %v776 = vadd.f32 %v711, %v775
  %777 = vdwg.mxu0
  %778 = vmatpush.msra.mxu0 0.0
  %779 = vmatpush.msra.mxu0 0.0
  %780 = vmatpush.msra.mxu0 0.0
  %781 = vmatpush.msra.mxu0 0.0
  %782 = vmatpush.msra.mxu0 0.0
  %783 = vmatpush.msra.mxu0 0.0
  %784 = vmatpush.msra.mxu0 0.0
  %785 = vmatpush.msra.mxu0 0.0
  %786 = vmatpush.msra.mxu0 %v269
  %787 = vmatpush.msra.mxu0 %v268
  %788 = vmatpush.msra.mxu0 %v267
  %789 = vmatpush.msra.mxu0 %v266
  %790 = vmatpush.msra.mxu0 %v265
  %791 = vmatpush.msra.mxu0 %v264
  %792 = vmatpush.msra.mxu0 %v263
  %793 = vmatpush.msra.mxu0 %v262
  %794 = vmatmul.f32.gmra.mxu0 %v276
  %v795 = vpop.f32.mrf.mxu0
  %v796 = vadd.f32 %v731, %v795
  %797 = vmatmul.f32.gmra.mxu0 %v279
  %v798 = vpop.f32.mrf.mxu0
  %v799 = vadd.f32 %v734, %v798
  %800 = vmatmul.f32.gmra.mxu0 %v282
  %v801 = vpop.f32.mrf.mxu0
  %v802 = vadd.f32 %v737, %v801
  %803 = vmatmul.f32.gmra.mxu0 %v285
  %v804 = vpop.f32.mrf.mxu0
  %v805 = vadd.f32 %v740, %v804
  %806 = vmatmul.f32.gmra.mxu0 %v288
  %v807 = vpop.f32.mrf.mxu0
  %v808 = vadd.f32 %v743, %v807
  %809 = vmatmul.f32.gmra.mxu0 %v291
  %v810 = vpop.f32.mrf.mxu0
  %v811 = vadd.f32 %v746, %v810
  %812 = vmatmul.f32.gmra.mxu0 %v294
  %v813 = vpop.f32.mrf.mxu0
  %v814 = vadd.f32 %v749, %v813
  %815 = vmatmul.f32.gmra.mxu0 %v297
  %v816 = vpop.f32.mrf.mxu0
  %v817 = vadd.f32 %v752, %v816
  %818 = vmatmul.f32.gmra.mxu0 %v300
  %v819 = vpop.f32.mrf.mxu0
  %v820 = vadd.f32 %v755, %v819
  %821 = vmatmul.f32.gmra.mxu0 %v303
  %v822 = vpop.f32.mrf.mxu0
  %v823 = vadd.f32 %v758, %v822
  %824 = vmatmul.f32.gmra.mxu0 %v306
  %v825 = vpop.f32.mrf.mxu0
  %v826 = vadd.f32 %v761, %v825
  %827 = vmatmul.f32.gmra.mxu0 %v309
  %v828 = vpop.f32.mrf.mxu0
  %v829 = vadd.f32 %v764, %v828
  %830 = vmatmul.f32.gmra.mxu0 %v312
  %v831 = vpop.f32.mrf.mxu0
  %v832 = vadd.f32 %v767, %v831
  %833 = vmatmul.f32.gmra.mxu0 %v315
  %v834 = vpop.f32.mrf.mxu0
  %v835 = vadd.f32 %v770, %v834
  %836 = vmatmul.f32.gmra.mxu0 %v318
  %v837 = vpop.f32.mrf.mxu0
  %v838 = vadd.f32 %v773, %v837
  %839 = vmatmul.f32.gmra.mxu0 %v321
  %v840 = vpop.f32.mrf.mxu0
  %v841 = vadd.f32 %v776, %v840
  %842 = vdwg.mxu0
  %v843 = vmax.f32 %v796, 0.0
  %v844 = vmax.f32 %v799, 0.0
  %v845 = vmax.f32 %v802, 0.0
  %v846 = vmax.f32 %v805, 0.0
  %v847 = vmax.f32 %v808, 0.0
  %v848 = vmax.f32 %v811, 0.0
  %v849 = vmax.f32 %v814, 0.0
  %v850 = vmax.f32 %v817, 0.0
  %v851 = vmax.f32 %v820, 0.0
  %v852 = vmax.f32 %v823, 0.0
  %v853 = vmax.f32 %v826, 0.0
  %v854 = vmax.f32 %v829, 0.0
  %v855 = vmax.f32 %v832, 0.0
  %v856 = vmax.f32 %v835, 0.0
  %v857 = vmax.f32 %v838, 0.0
  %v858 = vmax.f32 %v841, 0.0
  %v859 = vld [vmem:[%s3] sm:$0xff]
  %v860 = vld [vmem:[%s3 + $0x8] sm:$0xff]
  %v861 = vld [vmem:[%s3 + $0x10] sm:$0xff]
  %v862 = vld [vmem:[%s3 + $0x18] sm:$0xff]
  %v863 = vld [vmem:[%s3 + $0x20] sm:$0xff]
  %v864 = vld [vmem:[%s3 + $0x28] sm:$0xff]
  %v865 = vld [vmem:[%s3 + $0x30] sm:$0xff]
  %v866 = vld [vmem:[%s3 + $0x38] sm:$0xff]
  %v867 = vmul.f32 %v843, %v859
  %v868 = vmul.f32 %v844, %v860
  %v869 = vmul.f32 %v845, %v861
  %v870 = vmul.f32 %v846, %v862
  %v871 = vmul.f32 %v847, %v863
  %v872 = vmul.f32 %v848, %v864
  %v873 = vmul.f32 %v849, %v865
  %v874 = vmul.f32 %v850, %v866
  %v875 = vmul.f32 %v851, %v859
  %v876 = vmul.f32 %v852, %v860
  %v877 = vmul.f32 %v853, %v861
  %v878 = vmul.f32 %v854, %v862
  %v879 = vmul.f32 %v855, %v863
  %v880 = vmul.f32 %v856, %v864
  %v881 = vmul.f32 %v857, %v865
  %v882 = vmul.f32 %v858, %v866
  %vm883 = vcmask 457728
  %v884 = vsel %vm883, %v867, 0.0
  %885 = vadd.xlane.f32.xlu0 %v884
  %v886 = vpop.xlane.xlu0 %885
  %v887 = vsel %vm883, %v868, 0.0
  %888 = vadd.xlane.f32.xlu0 %v887
  %v889 = vpop.xlane.xlu0 %888
  %v890 = vsel %vm883, %v869, 0.0
  %891 = vadd.xlane.f32.xlu0 %v890
  %v892 = vpop.xlane.xlu0 %891
  %v893 = vsel %vm883, %v870, 0.0
  %894 = vadd.xlane.f32.xlu0 %v893
  %v895 = vpop.xlane.xlu0 %894
  %v896 = vsel %vm883, %v871, 0.0
  %897 = vadd.xlane.f32.xlu0 %v896
  %v898 = vpop.xlane.xlu0 %897
  %v899 = vsel %vm883, %v872, 0.0
  %900 = vadd.xlane.f32.xlu0 %v899
  %v901 = vpop.xlane.xlu0 %900
  %v902 = vsel %vm883, %v873, 0.0
  %903 = vadd.xlane.f32.xlu0 %v902
  %v904 = vpop.xlane.xlu0 %903
  %v905 = vsel %vm883, %v874, 0.0
  %906 = vadd.xlane.f32.xlu0 %v905
  %v907 = vpop.xlane.xlu0 %906
  %v908 = vsel %vm883, %v875, 0.0
  %909 = vadd.xlane.f32.xlu0 %v908
  %v910 = vpop.xlane.xlu0 %909
  %v911 = vsel %vm883, %v876, 0.0
  %912 = vadd.xlane.f32.xlu0 %v911
  %v913 = vpop.xlane.xlu0 %912
  %v914 = vsel %vm883, %v877, 0.0
  %915 = vadd.xlane.f32.xlu0 %v914
  %v916 = vpop.xlane.xlu0 %915
  %v917 = vsel %vm883, %v878, 0.0
  %918 = vadd.xlane.f32.xlu0 %v917
  %v919 = vpop.xlane.xlu0 %918
  %v920 = vsel %vm883, %v879, 0.0
  %921 = vadd.xlane.f32.xlu0 %v920
  %v922 = vpop.xlane.xlu0 %921
  %v923 = vsel %vm883, %v880, 0.0
  %924 = vadd.xlane.f32.xlu0 %v923
  %v925 = vpop.xlane.xlu0 %924
  %v926 = vsel %vm883, %v881, 0.0
  %927 = vadd.xlane.f32.xlu0 %v926
  %v928 = vpop.xlane.xlu0 %927
  %v929 = vsel %vm883, %v882, 0.0
  %930 = vadd.xlane.f32.xlu0 %v929
  %v931 = vpop.xlane.xlu0 %930
  %v948 = vlaneseq
  %v949 = vand.u32 %v948, 127
  %v950 = vperm.slane %v886, %v949
  %v951 = vadd.s32 %v949, 4294967288
  %v952 = vperm.slane %v889, %v951
  %vm953 = vcmask 130112
  %v954 = vsel %vm953, %v952, %v950
  %v955 = vadd.s32 %v949, 4294967280
  %v956 = vperm.slane %v892, %v955
  %vm957 = vcmask 195712
  %v958 = vsel %vm957, %v956, %v954
  %v959 = vadd.s32 %v949, 4294967272
  %v960 = vperm.slane %v895, %v959
  %vm961 = vcmask 261312
  %v962 = vsel %vm961, %v960, %v958
  %v963 = vadd.s32 %v949, 4294967264
  %v964 = vperm.slane %v898, %v963
  %vm965 = vcmask 326912
  %v966 = vsel %vm965, %v964, %v962
  %v967 = vadd.s32 %v949, 4294967256
  %v968 = vperm.slane %v901, %v967
  %vm969 = vcmask 392512
  %v970 = vsel %vm969, %v968, %v966
  %v971 = vadd.s32 %v949, 4294967248
  %v972 = vperm.slane %v904, %v971
  %vm973 = vcmask 458112
  %v974 = vsel %vm973, %v972, %v970
  %v975 = vadd.s32 %v949, 4294967240
  %v976 = vperm.slane %v907, %v975
  %vm977 = vcmask 523712
  %v978 = vsel %vm977, %v976, %v974
  %v979 = vperm.slane %v910, %v949
  %v980 = vperm.slane %v913, %v951
  %v981 = vsel %vm953, %v980, %v979
  %v982 = vperm.slane %v916, %v955
  %v983 = vsel %vm957, %v982, %v981
  %v984 = vperm.slane %v919, %v959
  %v985 = vsel %vm961, %v984, %v983
  %v986 = vperm.slane %v922, %v963
  %v987 = vsel %vm965, %v986, %v985
  %v988 = vperm.slane %v925, %v967
  %v989 = vsel %vm969, %v988, %v987
  %v990 = vperm.slane %v928, %v971
  %v991 = vsel %vm973, %v990, %v989
  %v992 = vperm.slane %v931, %v975
  %v993 = vsel %vm977, %v992, %v991
  %vm994 = vcmask 1041409
  %v995 = vsel %vm994, %v993, %v978
  %vm997 = vcmask 517120
  %v998 = vsel %vm997, %v995, 0.0
  %999 = vadd.xlane.f32.xlu0 %v998
  %v1000 = vpop.xlane.xlu0 %999
  %v1001 = vld [vmem:[#allocation2] sm:$0x1]
  %v1003 = vperm.slane %v1001, 0
  %v1005 = vadd.f32 %v1000, %v1003
  %v1006 = vxor.u32 %v1005, 2147483648
  %v1007 = vmul.f32 %v1006, 1.442695
  %v1008 = vpow.pop %v1007
  %v1009 = vadd.f32 %v1008, 1.0
  %v1010 = vrcp.pop %v1009
  %v1011 = vmul.f32 %v1009, %v1010
  %v1012 = vsub.f32 1.0, %v1011
  %v1013 = vmul.f32 %v1010, %v1012
  %v1014 = vadd.f32 %v1010, %v1013
  %vm1015 = vweird.f32 %v1009
  %vm1016 = vweird.f32 %v1010
  %vm1017 = vmor %vm1015, %vm1016
  %v1018 = vsel %vm1017, %v1010, %v1014
  %v1019 = vand.u32 2147483647, %v1009
  %vm1020 = vcmp.eq.f32.partialorder %v1019, 8.507059e+37
  %v1021 = vand.u32 %v1009, 2147483648
  %v1022 = vor.u32 1.1754944e-38, %v1021
  %v1023 = vsel %vm1020, %v1022, %v1018
  %v1024 = vmul.f32 1.0, %v1023
  %vm1025 = vcmask 1024
  %1026 = vst.msk [vmem:[%s5] sm:$0x3] %vm1025, %v1024
  // Predicated region
  $region22: #{model_forward.1} parent=0 // pred_check
    _
  $region23: #{model_forward.1} parent=0 // pred_check_branch
    %1028 = sbr.rel (0) target = $region25
  $region24: #{model_forward.1} parent=0 // pred_region
    _
  $region25: #{model_forward.1} parent=0 // pred_fallthru
    _
  // Predicated region
  $region26: #{model_forward.1} parent=0 // pred_check
    _
  $region27: #{model_forward.1} parent=0 // pred_check_branch
    %1030 = sbr.rel (0) target = $region29
  $region28: #{model_forward.1} parent=0 // pred_region
    _
  $region29: #{model_forward.1} parent=0 // pred_fallthru
    _

</llo_original>
